<compile_context>
chip_gen: v6e
topology: v6e:2x2x1
jax: 0.10.0
libtpu: 0.0.40
codegen_flags: <defaults>
</compile_context>

<pallas_src>
import functools

import jax
import jax.numpy as jnp
from jax import lax
from jax.experimental import pallas as pl
from jax.experimental.pallas import tpu as pltpu


def _round_up(v, m):
    return (v + m - 1) // m * m


@functools.lru_cache(maxsize=None)
def _lane_shift_mode(n_lanes):
    """Resolve pltpu.roll's rotation direction once, eagerly, per lane count.

    Returns "roll_neg" if pltpu.roll follows jnp.roll semantics, "roll_pos" if
    it rotates the other way, "jnp" if the tiny probe fails to lower (then the
    kernel uses jnp.roll -- slower but always correct).  The probe operates on
    concrete arrays, so it resolves correctly even if the caller is being jit
    traced.
    """
    delta = 1
    x = jnp.tile(jnp.arange(n_lanes, dtype=jnp.float32), (8, 1))

    def probe(x_ref, o_ref):
        o_ref[...] = pltpu.roll(x_ref[...], (-delta) % n_lanes, axis=1)

    try:
        y = pl.pallas_call(
            probe, out_shape=jax.ShapeDtypeStruct((8, n_lanes), jnp.float32))(x)
        v = float(y[0, 0])
    except Exception:
        return "jnp"
    if v == float(delta):
        return "roll_neg"      # pltpu.roll has jnp.roll semantics
    if v == float((-delta) % n_lanes):
        return "roll_pos"      # opposite rotation convention
    return "jnp"


def _shift_lanes(v, delta, mode):
    """out[..., i] = v[..., i + delta].  Columns whose source is out of range
    only land in the zero-padding border that the wrapper crops away."""
    if delta == 0:
        return v
    n = v.shape[-1]
    if mode == "roll_neg":
        return pltpu.roll(v, (-delta) % n, axis=v.ndim - 1)
    if mode == "roll_pos":
        return pltpu.roll(v, delta % n, axis=v.ndim - 1)
    return jnp.roll(v, -delta, axis=-1)


def _gdfn_kernel(x_ref, w9_ref, wo_ref, o_ref, *, TD, Cp, F, W, shift_mode):
    # x_ref : ((D+2)*Cp, S2) f32   zero-padded volume, (depth, channel) folded
    #                              onto sublanes; resident across depth tiles.
    # w9_ref: (9*F, 3*Cp)    bf16  fused project_in x depthwise weights
    # wo_ref: (C,  F//2)     bf16  project_out
    # o_ref : (TD, C, S2)          output depth tile (padded HW; wrapper crops)
    t = pl.program_id(1)
    d0 = t * TD
    Fh = F // 2
    w9 = w9_ref[...]
    wo = wo_ref[...]
    # spatial tap -> lane shift on the flattened (H+2)*(W+2) plane
    deltas = [(kh - 1) * (W + 2) + (kw - 1) for kh in range(3) for kw in range(3)]

    def plane(d, carry):
        # The three padded input planes (kd = 0, 1, 2) needed by output plane
        # d0+d are one contiguous, 8-row-aligned sublane slice of the folded
        # input -- no slab assembly, no halo recompute.
        start = pl.multiple_of((d0 + d) * Cp, Cp)
        x3 = x_ref[pl.ds(start, 3 * Cp), :].astype(jnp.bfloat16)       # (3Cp, S2)

        # fused project_in + depth/channel contraction of the depthwise conv
        # on the MXU (K = 3*Cp), f32 accumulation.
        u = jnp.dot(w9, x3, preferred_element_type=jnp.float32)        # (9F, S2)

        # 9 spatial taps: lane-shift each per-tap slab (XLU) and accumulate.
        acc = _shift_lanes(u[0:F, :], deltas[0], shift_mode)
        for s in range(1, 9):
            acc = acc + _shift_lanes(u[s * F:(s + 1) * F, :], deltas[s],
                                     shift_mode)

        # chunk(2, channel) -> tanh-form GELU gate (EUP tanh, f32 VPU math)
        x1 = acc[:Fh, :]
        x2 = acc[Fh:, :]
        inner = 0.7978845608028654 * (x1 + 0.044715 * (x1 * x1 * x1))
        g = (0.5 * x1) * (1.0 + jnp.tanh(inner)) * x2                  # (Fh, S2)

        # project_out (1x1x1 conv) on the MXU, bf16 in / f32 acc
        out_p = jnp.dot(wo, g.astype(jnp.bfloat16),
                        preferred_element_type=jnp.float32)            # (C, S2)
        o_ref[d] = out_p.astype(o_ref.dtype)                           # lane-dense store
        return carry

    lax.fori_loop(0, TD, plane, 0)


def gdfn_pallas(x, w_in, w_dw, w_out, *, depth_tile=None):
    B, D, H, W, C = x.shape
    F = w_in.shape[1]
    assert w_in.shape == (C, F)
    assert F % 2 == 0 and w_out.shape == (F // 2, C), \
        "GDFN requires d_ff == 2 * d_model (project_out maps d_ff//2 -> d_model)"
    assert w_dw.shape == (27, F)

    # depth tile: divisor of D, <= 8, >= 2 tiles per batch when possible
    if depth_tile is None:
        cands = [d for d in range(1, D + 1) if D % d == 0 and d <= 8 and D // d >= 2]
        depth_tile = max(cands) if cands else D
    TD = depth_tile
    assert D % TD == 0
    T = D // TD
    S2 = (H + 2) * (W + 2)

    # channels padded to the f32 sublane tile so every 3-plane slice in the
    # kernel is 8-row aligned
    Cp = _round_up(C, 8)

    # --- layout plumbing (plain XLA, outside the kernel): channels-first,
    #     zero-padded depth/spatial halo, (H, W) flattened onto the lane axis,
    #     (depth, channel) folded onto the sublane axis -------------------------
    x_cf = jnp.transpose(x, (0, 1, 4, 2, 3))                            # (B, D, C, H, W)
    x_pad = jnp.pad(x_cf, ((0, 0), (1, 1), (0, Cp - C), (1, 1), (1, 1)))
    x_k = x_pad.reshape(B, (D + 2) * Cp, S2).astype(jnp.float32)

    # fused project_in x depthwise weights: W9[(kh*3+kw)*F + f, kd*Cp + c]
    w_in_p = jnp.pad(w_in, ((0, Cp - C), (0, 0)))                        # (Cp, F)
    w_dw_r = w_dw.reshape(3, 9, F)                                       # (kd, khw, f)
    w9 = jnp.einsum('zsf,cf->sfzc', w_dw_r, w_in_p)                      # (9, F, 3, Cp)
    w9 = w9.reshape(9 * F, 3 * Cp).astype(jnp.bfloat16)
    wo = jnp.transpose(w_out).astype(jnp.bfloat16)                       # (C, F//2)

    shift_mode = _lane_shift_mode(S2)

    # --- VMEM budget from layout-padded block sizes (double-buffered inputs /
    #     outputs / weights + generous per-plane temporaries), clamped to the
    #     per-generation VMEM capacity with headroom -----------------------------
    S2p = _round_up(S2, 128)
    in_blk = _round_up((D + 2) * Cp, 8) * S2p * 4                        # f32 input
    out_blk = TD * _round_up(C, 8) * S2p * jnp.dtype(x.dtype).itemsize
    w_blk = (_round_up(9 * F, 16) * _round_up(3 * Cp, 128)
             + _round_up(C, 16) * _round_up(F // 2, 128)) * 2            # bf16 weights
    tmp_blk = (4 * _round_up(9 * F, 8) + 6 * _round_up(F, 8)) * S2p * 4  # u/acc/g temps
    est = 2 * (in_blk + out_blk + w_blk) + tmp_blk + (2 << 20)
    try:
        cap = int(pltpu.get_tpu_info().vmem_capacity_bytes)
    except Exception:
        cap = 64 << 20
    vmem_limit = int(max(16 << 20, min(est, int(cap * 0.85))))

    # NOTE: for very large H*W on v7x (64 MiB/TC), the resident full-volume
    # input should become a manually DMA'd (TD+2)-plane window (memory_space=
    # pl.ANY + make_async_copy); not needed at these and typical HSDT sizes.

    kern = functools.partial(_gdfn_kernel, TD=TD, Cp=Cp, F=F, W=W,
                             shift_mode=shift_mode)
    out_k = pl.pallas_call(
        kern,
        out_shape=jax.ShapeDtypeStruct((B, D, C, S2), x.dtype),
        grid_spec=pltpu.PrefetchScalarGridSpec(
            num_scalar_prefetch=0,
            grid=(B, T),                       # batch x depth-tiles
            in_specs=[
                # full padded volume of one batch element; resident across the
                # depth-tile axis (re-DMA'd only when b changes)
                pl.BlockSpec((None, (D + 2) * Cp, S2), lambda b, t: (b, 0, 0)),
                pl.BlockSpec((9 * F, 3 * Cp), lambda b, t: (0, 0)),
                pl.BlockSpec((C, F // 2), lambda b, t: (0, 0)),
            ],
            out_specs=pl.BlockSpec((None, TD, C, S2), lambda b, t: (b, t, 0, 0)),
        ),
        compiler_params=pltpu.CompilerParams(
            dimension_semantics=("parallel", "arbitrary"),
            vmem_limit_bytes=vmem_limit),
    )(x_k, w9, wo)

    # crop the HW halo and go back to channels-last
    out = out_k.reshape(B, D, C, H + 2, W + 2)[:, :, :, 1:H + 1, 1:W + 1]
    return jnp.transpose(out, (0, 1, 3, 4, 2))                           # (B, D, H, W, C)


def gdfn_ref(x, w_in, w_dw, w_out):
    """Pure-JAX f32 reference matching the PyTorch forward (channels-last)."""
    B, D, H, W, C = x.shape
    F = w_in.shape[1]
    y = jnp.einsum('bdhwc,cf->bdhwf', x, w_in)
    k = w_dw.reshape(3, 3, 3, 1, F)
    z = jax.lax.conv_general_dilated(
        y, k, window_strides=(1, 1, 1), padding='SAME',
        dimension_numbers=('NDHWC', 'DHWIO', 'NDHWC'),
        feature_group_count=F)
    x1, x2 = z[..., :F // 2], z[..., F // 2:]
    g = jax.nn.gelu(x1, approximate=False) * x2
    return jnp.einsum('bdhwf,fc->bdhwc', g, w_out)


if __name__ == "__main__":
    key = jax.random.PRNGKey(0)
    B, D, H, W = 2, 4, 8, 8
    d_model = 8
    d_ff = 2 * d_model           # required so project_out (d_model->d_model) is consistent

    k1, k2, k3, k4 = jax.random.split(key, 4)
    x = jax.random.normal(k1, (B, D, H, W, d_model), jnp.float32)
    # deterministic synthetic weights (conv weights, no bias)
    w_in = 0.1 * jax.random.normal(k2, (d_model, d_ff), jnp.float32)        # project_in
    w_dw = 0.1 * jax.random.normal(k3, (27, d_ff), jnp.float32)             # depthwise 3x3x3
    w_out = 0.1 * jax.random.normal(k4, (d_ff // 2, d_model), jnp.float32)  # project_out

    out = jax.block_until_ready(gdfn_pallas(x, w_in, w_dw, w_out))

    ref = gdfn_ref(x, w_in, w_dw, w_out)
    err = float(jnp.max(jnp.abs(out - ref)))
    # Tolerance accounts for bf16 MXU inputs and the tanh-form GELU; measured
    # error at these scales is far below this bound.
    assert jnp.allclose(out, ref, atol=5e-3, rtol=5e-3), f"max abs err {err}"
    print("KERNEL_OK")
</pallas_src>

<mosaic_0001>
module attributes {stable_mosaic.version = 11 : i64} {
  func.func @probe(%arg0: memref<8x100xf32, #tpu.memory_space<vmem>>, %arg1: memref<8x100xf32, #tpu.memory_space<vmem>>) attributes {dimension_semantics = [], scalar_prefetch = 0 : i64, scratch_operands = 0 : i64, tpu.core_type = #tpu.core_type<tc>} {
    %c0 = arith.constant 0 : index
    %c0_0 = arith.constant 0 : index
    %0 = vector.load %arg0[%c0, %c0_0] : memref<8x100xf32, #tpu.memory_space<vmem>>, vector<8x100xf32>
    %c99_i32 = arith.constant 99 : i32
    %1 = tpu.dynamic_rotate %0 by %c99_i32 dim 1 : vector<8x100xf32>, i32 -> vector<8x100xf32>
    %c0_1 = arith.constant 0 : index
    %c0_2 = arith.constant 0 : index
    %2 = vector.load %arg1[%c0_1, %c0_2] : memref<8x100xf32, #tpu.memory_space<vmem>>, vector<8x100xf32>
    tpu.vector_store %arg1[%c0_1, %c0_2], %1 {strides = array<i32>} : memref<8x100xf32, #tpu.memory_space<vmem>>, vector<8x100xf32>,
    return
  }
}

module attributes {stable_mosaic.version = 11 : i64} {
  func.func @_gdfn_kernel(%arg0: i32, %arg1: i32, %arg2: memref<1x48x100xf32, #tpu.memory_space<vmem>>, %arg3: memref<144x24xbf16, #tpu.memory_space<vmem>>, %arg4: memref<8x8xbf16, #tpu.memory_space<vmem>>, %arg5: memref<1x2x8x100xf32, #tpu.memory_space<vmem>>) attributes {dimension_semantics = [#tpu.dimension_semantics<parallel>, #tpu.dimension_semantics<arbitrary>], iteration_bounds = array<i64: 2, 2>, scalar_prefetch = 0 : i64, scratch_operands = 0 : i64, tpu.core_type = #tpu.core_type<tc>, window_params = [{transform_indices = @transform_0, window_bounds = array<i64: 1, 48, 100>}, {pipeline_mode = #tpu.pipeline_mode<synchronous>, transform_indices = @transform_1, window_bounds = array<i64: 144, 24>}, {pipeline_mode = #tpu.pipeline_mode<synchronous>, transform_indices = @transform_2, window_bounds = array<i64: 8, 8>}, {transform_indices = @transform_3, window_bounds = array<i64: 1, 2, 8, 100>}]} {
    %c2_i32 = arith.constant 2 : i32
    %0 = arith.muli %arg1, %c2_i32 : i32
    %c0 = arith.constant 0 : index
    %c0_0 = arith.constant 0 : index
    %1 = vector.load %arg3[%c0, %c0_0] : memref<144x24xbf16, #tpu.memory_space<vmem>>, vector<144x24xbf16>
    %c0_1 = arith.constant 0 : index
    %c0_2 = arith.constant 0 : index
    %2 = vector.load %arg4[%c0_1, %c0_2] : memref<8x8xbf16, #tpu.memory_space<vmem>>, vector<8x8xbf16>
    %c0_i32 = arith.constant 0 : i32
    %c2_i32_3 = arith.constant 2 : i32
    %3 = arith.addi %c0_i32, %c2_i32_3 : i32
    %c1_i32 = arith.constant 1 : i32
    scf.for %arg6 = %c0_i32 to %3 step %c1_i32  : i32 {
      %4 = arith.addi %0, %arg6 : i32
      %c8_i32 = arith.constant 8 : i32
      %5 = arith.muli %4, %c8_i32 : i32
      %6 = tpu.assume_multiple %5, 8 : i32
      %c0_5 = arith.constant 0 : index
      %7 = arith.index_cast %6 : i32 to index
      %c0_6 = arith.constant 0 : index
      %8 = vector.load %arg2[%c0_5, %7, %c0_6] : memref<1x48x100xf32, #tpu.memory_space<vmem>>, vector<1x24x100xf32>
      %9 = vector.shape_cast %8 : vector<1x24x100xf32> to vector<24x100xf32>
      %10 = arith.truncf %9 : vector<24x100xf32> to vector<24x100xbf16>
      %cst = arith.constant dense<0.000000e+00> : vector<144x100xf32>
      %11 = tpu.matmul %1, %10, %cst {dimension_numbers = #tpu.dot_dimension_numbers<[1], [0], [0], [1], [0, 0, 1, 1], [], []>} : vector<144x24xbf16>, vector<24x100xbf16>, vector<144x100xf32> -> vector<144x100xf32>
      %12 = vector.extract_strided_slice %11 {offsets = [0, 0], sizes = [16, 100], strides = [1, 1]} : vector<144x100xf32> to vector<16x100xf32>
      %13 = vector.extract_strided_slice %12 {offsets = [0, 89], sizes = [16, 11], strides = [1, 1]} : vector<16x100xf32> to vector<16x11xf32>
      %14 = vector.extract_strided_slice %12 {offsets = [0, 0], sizes = [16, 89], strides = [1, 1]} : vector<16x100xf32> to vector<16x89xf32>
      %15 = tpu.concatenate %13, %14 in 1 : vector<16x11xf32>, vector<16x89xf32> -> vector<16x100xf32>
      %16 = vector.extract_strided_slice %11 {offsets = [16, 0], sizes = [16, 100], strides = [1, 1]} : vector<144x100xf32> to vector<16x100xf32>
      %17 = vector.extract_strided_slice %16 {offsets = [0, 90], sizes = [16, 10], strides = [1, 1]} : vector<16x100xf32> to vector<16x10xf32>
      %18 = vector.extract_strided_slice %16 {offsets = [0, 0], sizes = [16, 90], strides = [1, 1]} : vector<16x100xf32> to vector<16x90xf32>
      %19 = tpu.concatenate %17, %18 in 1 : vector<16x10xf32>, vector<16x90xf32> -> vector<16x100xf32>
      %20 = arith.addf %15, %19 : vector<16x100xf32>
      %21 = vector.extract_strided_slice %11 {offsets = [32, 0], sizes = [16, 100], strides = [1, 1]} : vector<144x100xf32> to vector<16x100xf32>
      %22 = vector.extract_strided_slice %21 {offsets = [0, 91], sizes = [16, 9], strides = [1, 1]} : vector<16x100xf32> to vector<16x9xf32>
      %23 = vector.extract_strided_slice %21 {offsets = [0, 0], sizes = [16, 91], strides = [1, 1]} : vector<16x100xf32> to vector<16x91xf32>
      %24 = tpu.concatenate %22, %23 in 1 : vector<16x9xf32>, vector<16x91xf32> -> vector<16x100xf32>
      %25 = arith.addf %20, %24 : vector<16x100xf32>
      %26 = vector.extract_strided_slice %11 {offsets = [48, 0], sizes = [16, 100], strides = [1, 1]} : vector<144x100xf32> to vector<16x100xf32>
      %27 = vector.extract_strided_slice %26 {offsets = [0, 99], sizes = [16, 1], strides = [1, 1]} : vector<16x100xf32> to vector<16x1xf32>
      %28 = vector.extract_strided_slice %26 {offsets = [0, 0], sizes = [16, 99], strides = [1, 1]} : vector<16x100xf32> to vector<16x99xf32>
      %29 = tpu.concatenate %27, %28 in 1 : vector<16x1xf32>, vector<16x99xf32> -> vector<16x100xf32>
      %30 = arith.addf %25, %29 : vector<16x100xf32>
      %31 = vector.extract_strided_slice %11 {offsets = [64, 0], sizes = [16, 100], strides = [1, 1]} : vector<144x100xf32> to vector<16x100xf32>
      %32 = arith.addf %30, %31 : vector<16x100xf32>
      %33 = vector.extract_strided_slice %11 {offsets = [80, 0], sizes = [16, 100], strides = [1, 1]} : vector<144x100xf32> to vector<16x100xf32>
      %34 = vector.extract_strided_slice %33 {offsets = [0, 1], sizes = [16, 99], strides = [1, 1]} : vector<16x100xf32> to vector<16x99xf32>
      %35 = vector.extract_strided_slice %33 {offsets = [0, 0], sizes = [16, 1], strides = [1, 1]} : vector<16x100xf32> to vector<16x1xf32>
      %36 = tpu.concatenate %34, %35 in 1 : vector<16x99xf32>, vector<16x1xf32> -> vector<16x100xf32>
      %37 = arith.addf %32, %36 : vector<16x100xf32>
      %38 = vector.extract_strided_slice %11 {offsets = [96, 0], sizes = [16, 100], strides = [1, 1]} : vector<144x100xf32> to vector<16x100xf32>
      %39 = vector.extract_strided_slice %38 {offsets = [0, 9], sizes = [16, 91], strides = [1, 1]} : vector<16x100xf32> to vector<16x91xf32>
      %40 = vector.extract_strided_slice %38 {offsets = [0, 0], sizes = [16, 9], strides = [1, 1]} : vector<16x100xf32> to vector<16x9xf32>
      %41 = tpu.concatenate %39, %40 in 1 : vector<16x91xf32>, vector<16x9xf32> -> vector<16x100xf32>
      %42 = arith.addf %37, %41 : vector<16x100xf32>
      %43 = vector.extract_strided_slice %11 {offsets = [112, 0], sizes = [16, 100], strides = [1, 1]} : vector<144x100xf32> to vector<16x100xf32>
      %44 = vector.extract_strided_slice %43 {offsets = [0, 10], sizes = [16, 90], strides = [1, 1]} : vector<16x100xf32> to vector<16x90xf32>
      %45 = vector.extract_strided_slice %43 {offsets = [0, 0], sizes = [16, 10], strides = [1, 1]} : vector<16x100xf32> to vector<16x10xf32>
      %46 = tpu.concatenate %44, %45 in 1 : vector<16x90xf32>, vector<16x10xf32> -> vector<16x100xf32>
      %47 = arith.addf %42, %46 : vector<16x100xf32>
      %48 = vector.extract_strided_slice %11 {offsets = [128, 0], sizes = [16, 100], strides = [1, 1]} : vector<144x100xf32> to vector<16x100xf32>
      %49 = vector.extract_strided_slice %48 {offsets = [0, 11], sizes = [16, 89], strides = [1, 1]} : vector<16x100xf32> to vector<16x89xf32>
      %50 = vector.extract_strided_slice %48 {offsets = [0, 0], sizes = [16, 11], strides = [1, 1]} : vector<16x100xf32> to vector<16x11xf32>
      %51 = tpu.concatenate %49, %50 in 1 : vector<16x89xf32>, vector<16x11xf32> -> vector<16x100xf32>
      %52 = arith.addf %47, %51 : vector<16x100xf32>
      %53 = vector.extract_strided_slice %52 {offsets = [0, 0], sizes = [8, 100], strides = [1, 1]} : vector<16x100xf32> to vector<8x100xf32>
      %54 = vector.extract_strided_slice %52 {offsets = [8, 0], sizes = [8, 100], strides = [1, 1]} : vector<16x100xf32> to vector<8x100xf32>
      %55 = arith.mulf %53, %53 : vector<8x100xf32>
      %56 = arith.mulf %55, %53 : vector<8x100xf32>
      %cst_7 = arith.constant 4.471500e-02 : f32
      %57 = vector.broadcast %cst_7 : f32 to vector<8x100xf32>
      %58 = arith.mulf %57, %56 : vector<8x100xf32>
      %59 = arith.addf %53, %58 : vector<8x100xf32>
      %cst_8 = arith.constant 0.797884583 : f32
      %60 = vector.broadcast %cst_8 : f32 to vector<8x100xf32>
      %61 = arith.mulf %60, %59 : vector<8x100xf32>
      %cst_9 = arith.constant 5.000000e-01 : f32
      %62 = vector.broadcast %cst_9 : f32 to vector<8x100xf32>
      %63 = arith.mulf %62, %53 : vector<8x100xf32>
      %64 = math.tanh %61 : vector<8x100xf32>
      %cst_10 = arith.constant 1.000000e+00 : f32
      %65 = vector.broadcast %cst_10 : f32 to vector<8x100xf32>
      %66 = arith.addf %65, %64 : vector<8x100xf32>
      %67 = arith.mulf %63, %66 : vector<8x100xf32>
      %68 = arith.mulf %67, %54 : vector<8x100xf32>
      %69 = arith.truncf %68 : vector<8x100xf32> to vector<8x100xbf16>
      %cst_11 = arith.constant dense<0.000000e+00> : vector<8x100xf32>
      %70 = tpu.matmul %2, %69, %cst_11 {dimension_numbers = #tpu.dot_dimension_numbers<[1], [0], [0], [1], [0, 0, 1, 1], [], []>} : vector<8x8xbf16>, vector<8x100xbf16>, vector<8x100xf32> -> vector<8x100xf32>
      %c0_12 = arith.constant 0 : index
      %71 = arith.index_cast %arg6 : i32 to index
      %c0_13 = arith.constant 0 : index
      %c0_14 = arith.constant 0 : index
      %72 = vector.load %arg5[%c0_12, %71, %c0_13, %c0_14] : memref<1x2x8x100xf32, #tpu.memory_space<vmem>>, vector<1x1x8x100xf32>
      %73 = vector.shape_cast %72 : vector<1x1x8x100xf32> to vector<8x100xf32>
      %74 = vector.shape_cast %70 : vector<8x100xf32> to vector<1x1x8x100xf32>
      tpu.vector_store %arg5[%c0_12, %71, %c0_13, %c0_14], %74 {strides = array<i32>} : memref<1x2x8x100xf32, #tpu.memory_space<vmem>>, vector<1x1x8x100xf32>,
    }
    %c2_i32_4 = arith.constant 2 : i32
    return
  }
  func.func @transform_0(%arg0: i32, %arg1: i32) -> (i32, i32, i32) {
    %c0_i32 = arith.constant 0 : i32
    %c0_i32_0 = arith.constant 0 : i32
    %c0_i32_1 = arith.constant 0 : i32
    return %arg0, %c0_i32, %c0_i32_0 : i32, i32, i32
  }
  func.func @transform_1(%arg0: i32, %arg1: i32) -> (i32, i32) {
    %c0_i32 = arith.constant 0 : i32
    %c0_i32_0 = arith.constant 0 : i32
    %c0_i32_1 = arith.constant 0 : i32
    return %c0_i32, %c0_i32_0 : i32, i32
  }
  func.func @transform_2(%arg0: i32, %arg1: i32) -> (i32, i32) {
    %c0_i32 = arith.constant 0 : i32
    %c0_i32_0 = arith.constant 0 : i32
    %c0_i32_1 = arith.constant 0 : i32
    return %c0_i32, %c0_i32_0 : i32, i32
  }
  func.func @transform_3(%arg0: i32, %arg1: i32) -> (i32, i32, i32, i32) {
    %c0_i32 = arith.constant 0 : i32
    %c0_i32_0 = arith.constant 0 : i32
    %c0_i32_1 = arith.constant 0 : i32
    return %arg0, %arg1, %c0_i32, %c0_i32_0 : i32, i32, i32, i32
  }
}

</mosaic_0001>

<llo_original>
// kernel: tpu_custom_call.1
$region0: #{tpu_custom_call.1}
  #allocation0 [shape = 'u32[]', space=smem, size = 0x4, offset = 0x4, fixed_abs, tag = 'smem constant byte address 0x4 - core index']
  #allocation1 [shape = 'u32[144,128]{1,0:T(1,128)}', space=vmem, size = 0x12000, scoped, tag = 'internal scratch']
  %s0 = inlined_call_operand.hbm [shape: f32[8,100], index: 0, kind: input, shape index: {}]
  %s1 = inlined_call_operand.hbm [shape: f32[8,100], index: 1, kind: output, shape index: {}]
  %s2 = sld [smem:[#allocation0]]
  $region18: #{tpu_custom_call.1} parent=0
    _
  %s4 = ssub.s32 1, %s2
  %s5 = scalar_select 0, %s4, %s2
  $region1: #{tpu_custom_call.1} parent=0
    #allocation2 [shape = 'u8[4096]{0}', space=vmem, size = 0x1000, scoped, tag = 'input window, operand 0, single buffered']
    #allocation3 [shape = 's32[1]{0}', space=sflag, size = 0x4, scoped, tag = 'scoped memory for tpu_custom_call.1']
    #allocation4 [shape = 's32[1]{0}', space=sflag, size = 0x4, scoped, tag = 'scoped memory for tpu_custom_call.1']
    #allocation5 [shape = 'u8[4096]{0}', space=vmem, size = 0x1000, scoped, tag = 'output window, operand 0, single buffered']
    %6 = vsyncpa [#allocation3], 0
    %7 = vsyncpa [#allocation4], 0
    // Predicated region
    $region2: #{tpu_custom_call.1} parent=1 // pred_check
      _
    $region3: #{tpu_custom_call.1} parent=1 // pred_check_branch
      %9 = sbr.rel (0) target = $region5
    $region4: #{tpu_custom_call.1} parent=1 // pred_region
      %s11 = ssub.s32 128, 128
      %12 = vsyncadd [#allocation3], %s11
      %s14 = sshll.u32 [#allocation2], 4
      %s15 = int_to_ptr.vmem [resolvable:$true] %s14
      %17 = dma.hbm_to_vmem [thread:$0]  %s0, 128, %s15, [#allocation3]
    $region5: #{tpu_custom_call.1} parent=1 // pred_fallthru
      _
    // Predicated region
    $region6: #{tpu_custom_call.1} parent=1 // pred_check
      _
    $region7: #{tpu_custom_call.1} parent=1 // pred_check_branch
      %19 = sbr.rel (0) target = $region9
    $region8: #{tpu_custom_call.1} parent=1 // pred_region
      %20 = dma.done [#allocation3], 128
    $region9: #{tpu_custom_call.1} parent=1 // pred_fallthru
      _
    %v21 = vld [vmem:[#allocation2] sm:$0xff]
    %vm22 = vcmask 1048352
    %23 = vrot.lane.b32.xlu0 %v21, 100
    %v24 = vpop.permute.xlu0 %23
    %v25 = vsel %vm22, %v24, %v21
    %26 = vrot.lane.b32.xlu0 %v25, 100
    %v27 = vpop.permute.xlu0 %26
    %v28 = vsel %vm22, %v27, %v21
    %30 = vrot.lane.b32.xlu0 %v28, 127
    %v31 = vpop.permute.xlu0 %30
    %vm33 = vcmask 818176
    %34 = vst.msk [vmem:[#allocation5] sm:$0xff] %vm33, %v31
    // Predicated region
    $region10: #{tpu_custom_call.1} parent=1 // pred_check
      _
    $region11: #{tpu_custom_call.1} parent=1 // pred_check_branch
      %36 = sbr.rel (0) target = $region13
    $region12: #{tpu_custom_call.1} parent=1 // pred_region
      %s38 = ssub.s32 128, 128
      %39 = vsyncadd [#allocation4], %s38
      %s41 = sshll.u32 [#allocation5], 4
      %s42 = int_to_ptr.vmem [resolvable:$true] %s41
      %44 = dma.vmem_to_hbm [thread:$0]  %s42, 128, %s1, [#allocation4]
    $region13: #{tpu_custom_call.1} parent=1 // pred_fallthru
      _
    // Predicated region
    $region14: #{tpu_custom_call.1} parent=1 // pred_check
      _
    $region15: #{tpu_custom_call.1} parent=1 // pred_check_branch
      %46 = sbr.rel (0) target = $region17
    $region16: #{tpu_custom_call.1} parent=1 // pred_region
      %47 = dma.done [#allocation4], 128
    $region17: #{tpu_custom_call.1} parent=1 // pred_fallthru
      _
    %48 = vsyncpa [#allocation3], 1
    %49 = vsyncpa [#allocation4], 1

// kernel: tpu_custom_call.1
$region0: #{tpu_custom_call.1}
  #allocation0 [shape = 'u32[]', space=smem, size = 0x4, offset = 0x4, fixed_abs, tag = 'smem constant byte address 0x4 - core index']
  #allocation1 [shape = 'u32[144,128]{1,0:T(1,128)}', space=vmem, size = 0x12000, scoped, tag = 'internal scratch']
  %s0 = inlined_call_operand.vmem [shape: f32[2,48,100], index: 0, kind: input, shape index: {}]
  %s1 = inlined_call_operand.vmem [shape: bf16[144,24], index: 1, kind: input, shape index: {}]
  %s2 = inlined_call_operand.hbm [shape: bf16[8,8], index: 2, kind: input, shape index: {}]
  %s3 = inlined_call_operand.hbm [shape: f32[2,4,8,100], index: 3, kind: output, shape index: {}]
  %s4 = sld [smem:[#allocation0]]
  $region56: #{tpu_custom_call.1} parent=0
    _
  %s6 = ssub.s32 1, %s4
  %s7 = scalar_select 0, %s6, %s4
  $region1: #{tpu_custom_call.1} parent=0
    #allocation2 [shape = 'u8[2048]{0}', space=vmem, size = 0x800, scoped, tag = 'input window, operand 2, single buffered']
    #allocation3 [shape = 's32[2]{0}', space=sflag, size = 0x8, scoped, tag = 'scoped memory for tpu_custom_call.1']
    #allocation4 [shape = 's32[2]{0}', space=sflag, size = 0x8, scoped, tag = 'scoped memory for tpu_custom_call.1']
    #allocation5 [shape = 'u8[16384]{0}', space=vmem, size = 0x4000, scoped, tag = 'output window, operand 0']
    %8 = vsyncpa [#allocation3], 0
    %9 = vsyncpa [#allocation4], 0
    %s10 = scalar_lea.sflag [#allocation4], 1
    %11 = vsyncpa %s10, 0
    loop: start=0, step=1, limit=6
    $region2: #{tpu_custom_call.1} parent=1 // loop_pre_header
      _
    $region3: #{tpu_custom_call.1} parent=1 // loop_header
      %s13 = sphi 0, %s17
      %p14 = scmp.ge.s32.totalorder %s13, 6
      %s20 = sphi 0, %s32
      %s21 = sphi 0, %s28
      %s22 = sphi 0, %s20
      %s23 = sphi 0, %s21
      %s24 = sphi 0, %s22
      %s25 = sphi 0, %s23
      %s35 = sphi 0, %s37
      %s38 = sphi 0, %s35
      %s39 = sphi 0, %s38
      %s55 = sphi 0, %s39
      %s59 = sphi 0, %s59
      %s61 = sphi 0, %s59
      %s62 = sphi 0, %s61
      %s76 = sphi 0, %s62
      %s80 = sphi 0, %s80
      %s82 = sphi 0, %s80
      %s83 = sphi 0, %s82
      %s97 = sphi 0, %s83
      %s105 = sphi 0, %s107
      %s108 = sphi 0, %s105
      %s109 = sphi 0, %s108
      %s125 = sphi 0, %s109
    $region4: #{tpu_custom_call.1} parent=1 // loop_header_branch
      %16 = sbr.rel (%p14) target = $region8
    $region5: #{tpu_custom_call.1} parent=1 // loop_body
      %s18 = ssub.s32 %s13, 1
      %s19 = ssub.s32 %s13, 2
      %s26 = sadd.s32 1, %s21
      %p27 = scmp.ge.s32.totalorder %s26, 2
      %s28 = scalar_select %p27, 0, %s26
      %s29 = sadd.s32 1, %s20
      %s30 = scalar_select %p27, %s29, %s20
      %p31 = scmp.ge.s32.totalorder %s30, 2
      %s32 = scalar_select %p31, 0, %s30
      %s33 = ssub.s32 %s20, %s32
      %p34 = scmp.eq.s32.totalorder %s33, 0
      %s36 = sadd.s32 %s35, 1
      %s37 = scalar_select %p34, %s35, %s36
      %p40 = pneg %p34
      %p41 = scmp.eq.s32.totalorder %s13, 3
      %p42 = por %p40, %p41
      %p43 = scmp.ne.s32.totalorder %s35, %s38
      %p44 = scmp.eq.s32.totalorder %s13, 0
      %p45 = por %p43, %p44
      %p46 = scmp.ne.s32.totalorder %s35, %s38
      %p47 = scmp.eq.s32.totalorder %s18, 3
      %p48 = por %p46, %p47
      %p49 = scmp.ne.s32.totalorder %s38, %s39
      %p50 = scmp.eq.s32.totalorder %s18, 0
      %p51 = por %p49, %p50
      %p52 = scmp.ne.s32.totalorder %s38, %s39
      %p53 = scmp.eq.s32.totalorder %s19, 3
      %p54 = por %p52, %p53
      %p56 = scmp.ne.s32.totalorder %s39, %s55
      %p57 = scmp.eq.s32.totalorder %s19, 0
      %p58 = por %p56, %p57
      %s60 = sadd.s32 %s59, 1
      %p63 = scmp.eq.s32.totalorder %s13, 3
      %p64 = scmp.ne.s32.totalorder %s59, %s61
      %p65 = scmp.eq.s32.totalorder %s13, 0
      %p66 = por %p64, %p65
      %p67 = scmp.ne.s32.totalorder %s59, %s61
      %p68 = scmp.eq.s32.totalorder %s18, 3
      %p69 = por %p67, %p68
      %p70 = scmp.ne.s32.totalorder %s61, %s62
      %p71 = scmp.eq.s32.totalorder %s18, 0
      %p72 = por %p70, %p71
      %p73 = scmp.ne.s32.totalorder %s61, %s62
      %p74 = scmp.eq.s32.totalorder %s19, 3
      %p75 = por %p73, %p74
      %p77 = scmp.ne.s32.totalorder %s62, %s76
      %p78 = scmp.eq.s32.totalorder %s19, 0
      %p79 = por %p77, %p78
      %s81 = sadd.s32 %s80, 1
      %p84 = scmp.eq.s32.totalorder %s13, 3
      %p85 = scmp.ne.s32.totalorder %s80, %s82
      %p86 = scmp.eq.s32.totalorder %s13, 0
      %p87 = por %p85, %p86
      %p88 = scmp.ne.s32.totalorder %s80, %s82
      %p89 = scmp.eq.s32.totalorder %s18, 3
      %p90 = por %p88, %p89
      %p91 = scmp.ne.s32.totalorder %s82, %s83
      %p92 = scmp.eq.s32.totalorder %s18, 0
      %p93 = por %p91, %p92
      %p94 = scmp.ne.s32.totalorder %s82, %s83
      %p95 = scmp.eq.s32.totalorder %s19, 3
      %p96 = por %p94, %p95
      %p98 = scmp.ne.s32.totalorder %s83, %s97
      %p99 = scmp.eq.s32.totalorder %s19, 0
      %p100 = por %p98, %p99
      %s101 = ssub.s32 %s20, %s32
      %s102 = ssub.s32 %s21, %s28
      %s103 = sor.u32 %s101, %s102
      %p104 = scmp.eq.s32.totalorder %s103, 0
      %s106 = sadd.s32 %s105, 1
      %s107 = scalar_select %p104, %s105, %s106
      %p110 = pneg %p104
      %p111 = scmp.eq.s32.totalorder %s13, 3
      %p112 = por %p110, %p111
      %p113 = scmp.ne.s32.totalorder %s105, %s108
      %p114 = scmp.eq.s32.totalorder %s13, 0
      %p115 = por %p113, %p114
      %p116 = scmp.ne.s32.totalorder %s105, %s108
      %p117 = scmp.eq.s32.totalorder %s18, 3
      %p118 = por %p116, %p117
      %p119 = scmp.ne.s32.totalorder %s108, %s109
      %p120 = scmp.eq.s32.totalorder %s18, 0
      %p121 = por %p119, %p120
      %p122 = scmp.ne.s32.totalorder %s108, %s109
      %p123 = scmp.eq.s32.totalorder %s19, 3
      %p124 = por %p122, %p123
      %p126 = scmp.ne.s32.totalorder %s109, %s125
      %p127 = scmp.eq.s32.totalorder %s19, 0
      %p128 = por %p126, %p127
      %p129 = scmp.le.s32.totalorder 1, %s13
      %p130 = scmp.lt.s32.totalorder %s13, 5
      %p131 = pnand %p129, %p130
      %p132 = pneg %p131
      // Predicated region
      $region9: #{tpu_custom_call.1} parent=5 // pred_check
        _
      $region10: #{tpu_custom_call.1} parent=5 // pred_check_branch
        %134 = sbr.rel (%p131) target = $region12
      $region11: #{tpu_custom_call.1} parent=5 // pred_region
        %s135 = ssub.s32 %s13, 1
        // Predicated region
        $region13: #{tpu_custom_call.1} parent=11 // pred_check
          %p136 = pneg %p72
        $region14: #{tpu_custom_call.1} parent=11 // pred_check_branch
          %138 = sbr.rel (%p136) target = $region16
        $region15: #{tpu_custom_call.1} parent=11 // pred_region
          _
        $region16: #{tpu_custom_call.1} parent=11 // pred_fallthru
          _
        // Predicated region
        $region17: #{tpu_custom_call.1} parent=11 // pred_check
          %p139 = pneg %p93
        $region18: #{tpu_custom_call.1} parent=11 // pred_check_branch
          %141 = sbr.rel (%p139) target = $region20
        $region19: #{tpu_custom_call.1} parent=11 // pred_region
          %s143 = ssub.s32 64, 64
          %144 = vsyncadd [#allocation3], %s143
          %s146 = sshll.u32 [#allocation2], 4
          %s147 = int_to_ptr.vmem [resolvable:$true] %s146
          %149 = dma.hbm_to_vmem [thread:$0]  %s2, 64, %s147, [#allocation3]
        $region20: #{tpu_custom_call.1} parent=11 // pred_fallthru
          _
      $region12: #{tpu_custom_call.1} parent=5 // pred_fallthru
        _
      %p150 = scmp.lt.s32.totalorder %s13, 4
      // Predicated region
      $region21: #{tpu_custom_call.1} parent=5 // pred_check
        %p151 = pneg %p150
      $region22: #{tpu_custom_call.1} parent=5 // pred_check_branch
        %153 = sbr.rel (%p151) target = $region24
      $region23: #{tpu_custom_call.1} parent=5 // pred_region
        // Predicated region
        $region25: #{tpu_custom_call.1} parent=23 // pred_check
          %p154 = pneg %p45
        $region26: #{tpu_custom_call.1} parent=23 // pred_check_branch
          %156 = sbr.rel (%p154) target = $region28
        $region27: #{tpu_custom_call.1} parent=23 // pred_region
          %p157 = scmp.lt.s32.totalorder %s20, 1
          %s158 = scalar_select %p157, %s20, 1
          %s159 = smul.addr %s158, 6
          %s160 = smul.addr %s159, 8
          %s161 = scalar_lea.vmem %s0, %s160
        $region28: #{tpu_custom_call.1} parent=23 // pred_fallthru
          _
      $region24: #{tpu_custom_call.1} parent=5 // pred_fallthru
        _
      %p162 = scmp.le.s32.totalorder 1, %s13
      %p163 = scmp.lt.s32.totalorder %s13, 5
      %p164 = pnand %p162, %p163
      %p165 = pneg %p164
      // Predicated region
      $region29: #{tpu_custom_call.1} parent=5 // pred_check
        _
      $region30: #{tpu_custom_call.1} parent=5 // pred_check_branch
        %167 = sbr.rel (%p164) target = $region32
      $region31: #{tpu_custom_call.1} parent=5 // pred_region
        %s168 = ssub.s32 %s13, 1
        // Predicated region
        $region33: #{tpu_custom_call.1} parent=31 // pred_check
          %p169 = pneg %p93
        $region34: #{tpu_custom_call.1} parent=31 // pred_check_branch
          %171 = sbr.rel (%p169) target = $region36
        $region35: #{tpu_custom_call.1} parent=31 // pred_region
          %172 = dma.done [#allocation3], 64
        $region36: #{tpu_custom_call.1} parent=31 // pred_fallthru
          _
        %p173 = scmp.lt.s32.totalorder %s22, 1
        %s174 = scalar_select %p173, %s22, 1
        %s175 = smul.addr %s174, 6
        %s176 = smul.addr %s175, 8
        %s177 = scalar_lea.vmem %s0, %s176
        %p178 = pneg %p51
        %p179 = pneg %p48
        %p180 = pneg %p72
        %p181 = pneg %p69
        %p182 = pneg %p93
        %p183 = pneg %p90
        %p184 = pneg %p121
        %p185 = pneg %p118
        %s186 = sand.u32 %s108, 1
        %s187 = scalar_lea.sflag [#allocation4], %s186
        %s188 = sand.u32 %s108, 1
        %s189 = smul.addr %s188, 16
        %s190 = scalar_lea.vmem [#allocation5], %s189
        %p191 = scmp.lt.s32.totalorder %s22, 1
        %s192 = scalar_select %p191, %s22, 1
        %s193 = smul.addr %s192, 6
        %s194 = smul.addr %s193, 8
        %s195 = scalar_lea.vmem %s0, %s194
        %s196 = smul.u32 2, %s23
        %s198 = smul.u32 %s23, 2
        %v199 = vld [vmem:[%s1] sm:$0xf]
        %v200 = vld [vmem:[%s1 + $0x4] sm:$0xf]
        %v201 = vld [vmem:[%s1 + $0x8] sm:$0xf]
        %v202 = vld [vmem:[%s1 + $0xc] sm:$0xf]
        %v203 = vld [vmem:[%s1 + $0x10] sm:$0xf]
        %v204 = vld [vmem:[%s1 + $0x14] sm:$0xf]
        %v205 = vld [vmem:[%s1 + $0x18] sm:$0xf]
        %v206 = vld [vmem:[%s1 + $0x1c] sm:$0xf]
        %v207 = vld [vmem:[%s1 + $0x20] sm:$0xf]
        %v208 = vld [vmem:[%s1 + $0x24] sm:$0xf]
        %v209 = vld [vmem:[%s1 + $0x28] sm:$0xf]
        %v210 = vld [vmem:[%s1 + $0x2c] sm:$0xf]
        %v211 = vld [vmem:[%s1 + $0x30] sm:$0xf]
        %v212 = vld [vmem:[%s1 + $0x34] sm:$0xf]
        %v213 = vld [vmem:[%s1 + $0x38] sm:$0xf]
        %v214 = vld [vmem:[%s1 + $0x3c] sm:$0xf]
        %v215 = vld [vmem:[%s1 + $0x40] sm:$0xf]
        %v216 = vld [vmem:[%s1 + $0x44] sm:$0xf]
        %v217 = vld [vmem:[#allocation2] sm:$0xf]
        loop: start=0, step=1, limit=2
        $region37: #{tpu_custom_call.1} parent=31 // loop_pre_header
          _
        $region38: #{tpu_custom_call.1} parent=31 // loop_header
          %s219 = sphi 0, %s223
          %p220 = scmp.ge.s32.totalorder %s219, 2
        $region39: #{tpu_custom_call.1} parent=31 // loop_header_branch
          %222 = sbr.rel (%p220) target = $region43
        $region40: #{tpu_custom_call.1} parent=31 // loop_body
          %s224 = sadd.s32 %s198, %s219
          %s225 = smul.u32 %s224, 8
          %s226 = scalar_lea.vmem %s195, %s225
          %v227 = vld [vmem:[%s226] sm:$0xff]
          %v228 = vld [vmem:[%s226 + $0x8] sm:$0xff]
          %v229 = vld [vmem:[%s226 + $0x10] sm:$0xff]
          %v230 = vpack.c.bf16 %v228, %v227
          %v231 = vpack.c.bf16 %v229, %v229
          %v250 = vunpack.c.l.b16 %v199
          %v251 = vunpack.c.l.b16 %v200
          %v252 = vunpack.c.l.b16 %v201
          %v253 = vunpack.c.l.b16 %v202
          %v254 = vunpack.c.l.b16 %v203
          %v255 = vunpack.c.l.b16 %v204
          %v256 = vunpack.c.l.b16 %v205
          %v257 = vunpack.c.l.b16 %v206
          %v258 = vunpack.c.l.b16 %v207
          %v259 = vunpack.c.l.b16 %v208
          %v260 = vunpack.c.l.b16 %v209
          %v261 = vunpack.c.l.b16 %v210
          %v262 = vunpack.c.l.b16 %v211
          %v263 = vunpack.c.l.b16 %v212
          %v264 = vunpack.c.l.b16 %v213
          %v265 = vunpack.c.l.b16 %v214
          %v266 = vunpack.c.l.b16 %v215
          %v267 = vunpack.c.l.b16 %v216
          %v268 = vpack.c.b16 %v251, %v250
          %v269 = vpack.c.b16 %v253, %v252
          %v270 = vpack.c.b16 %v255, %v254
          %v271 = vpack.c.b16 %v257, %v256
          %v272 = vpack.c.b16 %v259, %v258
          %v273 = vpack.c.b16 %v261, %v260
          %v274 = vpack.c.b16 %v263, %v262
          %v275 = vpack.c.b16 %v265, %v264
          %v276 = vpack.c.b16 %v267, %v266
          %vm277 = vcmask 195584
          %v279 = vsel %vm277, %v268, 0
          %v282 = vsel %vm277, %v269, 0
          %v285 = vsel %vm277, %v270, 0
          %v288 = vsel %vm277, %v271, 0
          %v291 = vsel %vm277, %v272, 0
          %v294 = vsel %vm277, %v273, 0
          %v297 = vsel %vm277, %v274, 0
          %v300 = vsel %vm277, %v275, 0
          %v303 = vsel %vm277, %v276, 0
          %vm305 = vcmask 1043456
          %v307 = vsel %vm305, %v231, 0
          %309 = vmatprep.subr.bf16.mxu0 0
          %310 = vmatpush1.bf16.msra.mxu0 0
          %311 = vmatprep.subr.bf16.mxu0 0
          %312 = vmatpush1.bf16.msra.mxu0 0
          %313 = vmatprep.subr.bf16.mxu0 0
          %314 = vmatpush1.bf16.msra.mxu0 0
          %315 = vmatprep.subr.bf16.mxu0 0
          %316 = vmatpush1.bf16.msra.mxu0 0
          %317 = vmatprep.subr.bf16.mxu0 0
          %318 = vmatpush1.bf16.msra.mxu0 0
          %319 = vmatprep.subr.bf16.mxu0 0
          %320 = vmatpush1.bf16.msra.mxu0 0
          %321 = vmatprep.subr.bf16.mxu0 0
          %322 = vmatpush1.bf16.msra.mxu0 %v307
          %323 = vmatprep.subr.bf16.mxu0 0
          %324 = vmatpush1.bf16.msra.mxu0 %v230
          %325 = vmatprep.subr.bf16.mxu0 0
          %326 = vmatpush2.bf16.msra.mxu0 0
          %327 = vmatprep.subr.bf16.mxu0 0
          %328 = vmatpush2.bf16.msra.mxu0 0
          %329 = vmatprep.subr.bf16.mxu0 0
          %330 = vmatpush2.bf16.msra.mxu0 0
          %331 = vmatprep.subr.bf16.mxu0 0
          %332 = vmatpush2.bf16.msra.mxu0 0
          %333 = vmatprep.subr.bf16.mxu0 0
          %334 = vmatpush2.bf16.msra.mxu0 0
          %335 = vmatprep.subr.bf16.mxu0 0
          %336 = vmatpush2.bf16.msra.mxu0 0
          %337 = vmatprep.subr.bf16.mxu0 0
          %338 = vmatpush2.bf16.msra.mxu0 0
          %339 = vmatprep.subr.bf16.mxu0 0
          %340 = vmatpush2.bf16.msra.mxu0 0
          %341 = vmatprep.mubr.bf16.mxu0 0
          %342 = vmatmul.mubr.bf16.gmra.mxu0 %v279
          %v343 = vpop.f32.mrf.mxu0
          %v344 = vadd.f32 0.0, %v343
          %v345 = vpop.f32.mrf.mxu0
          %v346 = vpop.f32.mrf.mxu0
          %v347 = vadd.f32 0.0, %v346
          %v348 = vpop.f32.mrf.mxu0
          %349 = vmatprep.mubr.bf16.mxu0 0
          %350 = vmatmul.mubr.bf16.gmra.mxu0 %v282
          %v351 = vpop.f32.mrf.mxu0
          %v352 = vadd.f32 0.0, %v351
          %v353 = vpop.f32.mrf.mxu0
          %v354 = vpop.f32.mrf.mxu0
          %v355 = vadd.f32 0.0, %v354
          %v356 = vpop.f32.mrf.mxu0
          %357 = vmatprep.mubr.bf16.mxu0 0
          %358 = vmatmul.mubr.bf16.gmra.mxu0 %v285
          %v359 = vpop.f32.mrf.mxu0
          %v360 = vadd.f32 0.0, %v359
          %v361 = vpop.f32.mrf.mxu0
          %v362 = vpop.f32.mrf.mxu0
          %v363 = vadd.f32 0.0, %v362
          %v364 = vpop.f32.mrf.mxu0
          %365 = vmatprep.mubr.bf16.mxu0 0
          %366 = vmatmul.mubr.bf16.gmra.mxu0 %v288
          %v367 = vpop.f32.mrf.mxu0
          %v368 = vadd.f32 0.0, %v367
          %v369 = vpop.f32.mrf.mxu0
          %v370 = vpop.f32.mrf.mxu0
          %v371 = vadd.f32 0.0, %v370
          %v372 = vpop.f32.mrf.mxu0
          %373 = vmatprep.mubr.bf16.mxu0 0
          %374 = vmatmul.mubr.bf16.gmra.mxu0 %v291
          %v375 = vpop.f32.mrf.mxu0
          %v376 = vadd.f32 0.0, %v375
          %v377 = vpop.f32.mrf.mxu0
          %v378 = vpop.f32.mrf.mxu0
          %v379 = vadd.f32 0.0, %v378
          %v380 = vpop.f32.mrf.mxu0
          %381 = vmatprep.mubr.bf16.mxu0 0
          %382 = vmatmul.mubr.bf16.gmra.mxu0 %v294
          %v383 = vpop.f32.mrf.mxu0
          %v384 = vadd.f32 0.0, %v383
          %v385 = vpop.f32.mrf.mxu0
          %v386 = vpop.f32.mrf.mxu0
          %v387 = vadd.f32 0.0, %v386
          %v388 = vpop.f32.mrf.mxu0
          %389 = vmatprep.mubr.bf16.mxu0 0
          %390 = vmatmul.mubr.bf16.gmra.mxu0 %v297
          %v391 = vpop.f32.mrf.mxu0
          %v392 = vadd.f32 0.0, %v391
          %v393 = vpop.f32.mrf.mxu0
          %v394 = vpop.f32.mrf.mxu0
          %v395 = vadd.f32 0.0, %v394
          %v396 = vpop.f32.mrf.mxu0
          %397 = vmatprep.mubr.bf16.mxu0 0
          %398 = vmatmul.mubr.bf16.gmra.mxu0 %v300
          %v399 = vpop.f32.mrf.mxu0
          %v400 = vadd.f32 0.0, %v399
          %v401 = vpop.f32.mrf.mxu0
          %v402 = vpop.f32.mrf.mxu0
          %v403 = vadd.f32 0.0, %v402
          %v404 = vpop.f32.mrf.mxu0
          %405 = vmatprep.mubr.bf16.mxu0 0
          %406 = vmatmul.mubr.bf16.gmra.mxu0 %v303
          %v407 = vpop.f32.mrf.mxu0
          %v408 = vadd.f32 0.0, %v407
          %v409 = vpop.f32.mrf.mxu0
          %v410 = vpop.f32.mrf.mxu0
          %v411 = vadd.f32 0.0, %v410
          %v412 = vpop.f32.mrf.mxu0
          %413 = vdwg.mxu0
          %416 = vrot.lane.b32.xlu0 %v344, 39
          %v417 = vpop.permute.xlu0 %416
          %418 = vrot.lane.b32.xlu0 %v347, 39
          %v419 = vpop.permute.xlu0 %418
          %422 = vrot.lane.b32.xlu0 %v344, 11
          %v423 = vpop.permute.xlu0 %422
          %424 = vrot.lane.b32.xlu0 %v347, 11
          %v425 = vpop.permute.xlu0 %424
          %vm428 = vcmask 89088
          %v429 = vsel %vm428, %v417, %v423
          %v430 = vsel %vm428, %v419, %v425
          %433 = vrot.lane.b32.xlu0 %v352, 38
          %v434 = vpop.permute.xlu0 %433
          %435 = vrot.lane.b32.xlu0 %v355, 38
          %v436 = vpop.permute.xlu0 %435
          %439 = vrot.lane.b32.xlu0 %v352, 10
          %v440 = vpop.permute.xlu0 %439
          %441 = vrot.lane.b32.xlu0 %v355, 10
          %v442 = vpop.permute.xlu0 %441
          %vm445 = vcmask 80896
          %v446 = vsel %vm445, %v434, %v440
          %v447 = vsel %vm445, %v436, %v442
          %v448 = vadd.f32 %v429, %v446
          %v449 = vadd.f32 %v430, %v447
          %452 = vrot.lane.b32.xlu0 %v360, 37
          %v453 = vpop.permute.xlu0 %452
          %454 = vrot.lane.b32.xlu0 %v363, 37
          %v455 = vpop.permute.xlu0 %454
          %458 = vrot.lane.b32.xlu0 %v360, 9
          %v459 = vpop.permute.xlu0 %458
          %460 = vrot.lane.b32.xlu0 %v363, 9
          %v461 = vpop.permute.xlu0 %460
          %vm464 = vcmask 72704
          %v465 = vsel %vm464, %v453, %v459
          %v466 = vsel %vm464, %v455, %v461
          %v467 = vadd.f32 %v448, %v465
          %v468 = vadd.f32 %v449, %v466
          %471 = vrot.lane.b32.xlu0 %v368, 29
          %v472 = vpop.permute.xlu0 %471
          %473 = vrot.lane.b32.xlu0 %v371, 29
          %v474 = vpop.permute.xlu0 %473
          %477 = vrot.lane.b32.xlu0 %v368, 1
          %v478 = vpop.permute.xlu0 %477
          %479 = vrot.lane.b32.xlu0 %v371, 1
          %v480 = vpop.permute.xlu0 %479
          %vm483 = vcmask 7168
          %v484 = vsel %vm483, %v472, %v478
          %v485 = vsel %vm483, %v474, %v480
          %v486 = vadd.f32 %v467, %v484
          %v487 = vadd.f32 %v468, %v485
          %v488 = vadd.f32 %v486, %v376
          %v489 = vadd.f32 %v487, %v379
          %492 = vrot.lane.b32.xlu0 %v384, 127
          %v493 = vpop.permute.xlu0 %492
          %494 = vrot.lane.b32.xlu0 %v387, 127
          %v495 = vpop.permute.xlu0 %494
          %498 = vrot.lane.b32.xlu0 %v384, 99
          %v499 = vpop.permute.xlu0 %498
          %500 = vrot.lane.b32.xlu0 %v387, 99
          %v501 = vpop.permute.xlu0 %500
          %vm504 = vcmask 809984
          %v505 = vsel %vm504, %v493, %v499
          %v506 = vsel %vm504, %v495, %v501
          %v507 = vadd.f32 %v488, %v505
          %v508 = vadd.f32 %v489, %v506
          %511 = vrot.lane.b32.xlu0 %v392, 119
          %v512 = vpop.permute.xlu0 %511
          %513 = vrot.lane.b32.xlu0 %v395, 119
          %v514 = vpop.permute.xlu0 %513
          %517 = vrot.lane.b32.xlu0 %v392, 91
          %v518 = vpop.permute.xlu0 %517
          %519 = vrot.lane.b32.xlu0 %v395, 91
          %v520 = vpop.permute.xlu0 %519
          %vm523 = vcmask 744448
          %v524 = vsel %vm523, %v512, %v518
          %v525 = vsel %vm523, %v514, %v520
          %v526 = vadd.f32 %v507, %v524
          %v527 = vadd.f32 %v508, %v525
          %530 = vrot.lane.b32.xlu0 %v400, 118
          %v531 = vpop.permute.xlu0 %530
          %532 = vrot.lane.b32.xlu0 %v403, 118
          %v533 = vpop.permute.xlu0 %532
          %536 = vrot.lane.b32.xlu0 %v400, 90
          %v537 = vpop.permute.xlu0 %536
          %538 = vrot.lane.b32.xlu0 %v403, 90
          %v539 = vpop.permute.xlu0 %538
          %vm542 = vcmask 736256
          %v543 = vsel %vm542, %v531, %v537
          %v544 = vsel %vm542, %v533, %v539
          %v545 = vadd.f32 %v526, %v543
          %v546 = vadd.f32 %v527, %v544
          %549 = vrot.lane.b32.xlu0 %v408, 117
          %v550 = vpop.permute.xlu0 %549
          %551 = vrot.lane.b32.xlu0 %v411, 117
          %v552 = vpop.permute.xlu0 %551
          %555 = vrot.lane.b32.xlu0 %v408, 89
          %v556 = vpop.permute.xlu0 %555
          %557 = vrot.lane.b32.xlu0 %v411, 89
          %v558 = vpop.permute.xlu0 %557
          %vm561 = vcmask 728064
          %v562 = vsel %vm561, %v550, %v556
          %v563 = vsel %vm561, %v552, %v558
          %v564 = vadd.f32 %v545, %v562
          %v565 = vadd.f32 %v546, %v563
          %v566 = vmul.f32 %v564, %v564
          %v567 = vmul.f32 %v566, %v564
          %v568 = vmul.f32 %v567, 0.044715
          %v569 = vadd.f32 %v564, %v568
          %v570 = vmul.f32 %v569, 0.7978846
          %v571 = vmul.f32 %v564, 0.5
          %v572 = vtanh.pop %v570
          %v573 = vadd.f32 %v572, 1.0
          %v574 = vmul.f32 %v571, %v573
          %v575 = vmul.f32 %v574, %v565
          %v576 = vpack.c.bf16 %v575, %v575
          %vm577 = vcmask 64512
          %v579 = vsel %vm577, %v217, 0
          %v582 = vsel %vm305, %v576, 0
          %584 = vmatprep.subr.bf16.mxu0 0
          %585 = vmatpush1.bf16.msra.mxu0 0
          %586 = vmatprep.subr.bf16.mxu0 0
          %587 = vmatpush1.bf16.msra.mxu0 0
          %588 = vmatprep.subr.bf16.mxu0 0
          %589 = vmatpush1.bf16.msra.mxu0 0
          %590 = vmatprep.subr.bf16.mxu0 0
          %591 = vmatpush1.bf16.msra.mxu0 0
          %592 = vmatprep.subr.bf16.mxu0 0
          %593 = vmatpush1.bf16.msra.mxu0 0
          %594 = vmatprep.subr.bf16.mxu0 0
          %595 = vmatpush1.bf16.msra.mxu0 0
          %596 = vmatprep.subr.bf16.mxu0 0
          %597 = vmatpush1.bf16.msra.mxu0 0
          %598 = vmatprep.subr.bf16.mxu0 0
          %599 = vmatpush1.bf16.msra.mxu0 %v582
          %600 = vmatprep.subr.bf16.mxu0 0
          %601 = vmatpush2.bf16.msra.mxu0 0
          %602 = vmatprep.subr.bf16.mxu0 0
          %603 = vmatpush2.bf16.msra.mxu0 0
          %604 = vmatprep.subr.bf16.mxu0 0
          %605 = vmatpush2.bf16.msra.mxu0 0
          %606 = vmatprep.subr.bf16.mxu0 0
          %607 = vmatpush2.bf16.msra.mxu0 0
          %608 = vmatprep.subr.bf16.mxu0 0
          %609 = vmatpush2.bf16.msra.mxu0 0
          %610 = vmatprep.subr.bf16.mxu0 0
          %611 = vmatpush2.bf16.msra.mxu0 0
          %612 = vmatprep.subr.bf16.mxu0 0
          %613 = vmatpush2.bf16.msra.mxu0 0
          %614 = vmatprep.subr.bf16.mxu0 0
          %615 = vmatpush2.bf16.msra.mxu0 0
          %616 = vmatprep.mubr.bf16.mxu0 0
          %617 = vmatmul.mubr.bf16.gmra.mxu0 %v579
          %v618 = vpop.f32.mrf.mxu0
          %v619 = vadd.f32 0.0, %v618
          %v620 = vpop.f32.mrf.mxu0
          %v621 = vpop.f32.mrf.mxu0
          %v622 = vpop.f32.mrf.mxu0
          %623 = vdwg.mxu0
          %s624 = smul.u32 %s219, 8
          %s625 = scalar_lea.vmem %s190, %s624 [#allocation5]
          %vm626 = vcmask 818176
          %627 = vst.msk [vmem:[%s625] sm:$0xff] %vm626, %v619
        $region41: #{tpu_custom_call.1} parent=31 // loop_footer
          %s223 = sadd.s32 1, %s219
        $region42: #{tpu_custom_call.1} parent=31 // loop_footer_branch
          %218 = sbr.rel target = $region38
        $region43: #{tpu_custom_call.1} parent=31 // loop_exit
          _
        %s628 = sand.u32 %s108, 1
        %s629 = scalar_lea.sflag [#allocation4], %s628
        %s630 = sand.u32 %s108, 1
        %s631 = smul.addr %s630, 16
        %s632 = scalar_lea.vmem [#allocation5], %s631
        // Predicated region
        $region44: #{tpu_custom_call.1} parent=31 // pred_check
          %p633 = pneg %p118
        $region45: #{tpu_custom_call.1} parent=31 // pred_check_branch
          %635 = sbr.rel (%p633) target = $region47
        $region46: #{tpu_custom_call.1} parent=31 // pred_region
          %s636 = smul.u32 2, %s23
          %s638 = ssub.s32 256, 256
          %639 = vsyncadd %s629, %s638
          %s640 = smul.addr %s22, 4
          %s641 = sadd.s32 %s636, %s640
          %s642 = smul.addr %s641, 128
          %s643 = scalar_lea.hbm %s3, %s642
          %s644 = sshll.u32 %s632, 4
          %s645 = int_to_ptr.vmem [resolvable:$true] %s644
          %650 = dma.vmem_to_hbm [thread:$0]  %s645, 256, %s643, %s629, 128, 128, 8
        $region47: #{tpu_custom_call.1} parent=31 // pred_fallthru
          _
      $region32: #{tpu_custom_call.1} parent=5 // pred_fallthru
        _
      %p651 = scmp.le.s32.totalorder 2, %s13
      // Predicated region
      $region48: #{tpu_custom_call.1} parent=5 // pred_check
        %p652 = pneg %p651
      $region49: #{tpu_custom_call.1} parent=5 // pred_check_branch
        %654 = sbr.rel (%p652) target = $region51
      $region50: #{tpu_custom_call.1} parent=5 // pred_region
        %s655 = ssub.s32 %s13, 2
        // Predicated region
        $region52: #{tpu_custom_call.1} parent=50 // pred_check
          %p656 = pneg %p124
        $region53: #{tpu_custom_call.1} parent=50 // pred_check_branch
          %658 = sbr.rel (%p656) target = $region55
        $region54: #{tpu_custom_call.1} parent=50 // pred_region
          %s659 = sand.u32 %s109, 1
          %s660 = scalar_lea.sflag [#allocation4], %s659
          %s661 = sand.u32 %s109, 1
          %s662 = smul.addr %s661, 16
          %s663 = scalar_lea.vmem [#allocation5], %s662
          %664 = dma.done %s660, 256
        $region55: #{tpu_custom_call.1} parent=50 // pred_fallthru
          _
      $region51: #{tpu_custom_call.1} parent=5 // pred_fallthru
        _
    $region6: #{tpu_custom_call.1} parent=1 // loop_footer
      %s17 = sadd.s32 1, %s13
    $region7: #{tpu_custom_call.1} parent=1 // loop_footer_branch
      %12 = sbr.rel target = $region3
    $region8: #{tpu_custom_call.1} parent=1 // loop_exit
      _
    %665 = vsyncpa [#allocation3], 1
    %s666 = scalar_lea.sflag [#allocation3], 1
    %667 = vsyncpa %s666, 1
    %668 = vsyncpa [#allocation4], 1
    %s669 = scalar_lea.sflag [#allocation4], 1
    %670 = vsyncpa %s669, 1

</llo_original>
